<compile_context>
chip_gen: v5e
topology: v5e:2x2
jax: 0.10.0
libtpu: 0.0.40
codegen_flags: <defaults>
</compile_context>

<pallas_src>
import functools
import math

import jax
import jax.numpy as jnp
from jax.experimental import pallas as pl
from jax.experimental.pallas import tpu as pltpu


def _round_up(n: int, m: int) -> int:
    return ((n + m - 1) // m) * m


def _mlp_kernel(x_ref, w1_ref, b1_ref, w2_ref, b2_ref, o_ref, *, exact_gelu: bool):
    x = x_ref[...]                         # (tile_b, D)  f32 (or bf16 fast path)
    w1 = w1_ref[...]                       # (D, Hp)      same dtype as x
    # fc1 on the MXU, f32 accumulation; b1 broadcast-add on the VPU.
    h = jnp.dot(x, w1, preferred_element_type=jnp.float32) + b1_ref[...]
    if exact_gelu:
        # SLOW PATH: exact erf GELU (bit-parity with nn.GELU(approximate='none')).
        # erf lowers to a long VPU polynomial (no f32 FMA on v6e/v7x) and saturates the
        # VALU slot for a (tile_b, 256) f32 activation.
        h = 0.5 * h * (1.0 + jax.lax.erf(h * jnp.float32(1.0 / math.sqrt(2.0))))
    else:
        # DEFAULT fast path: tanh GELU -> transcendental runs on the otherwise-idle EUP slot.
        h = jax.nn.gelu(h, approximate=True)
    # Dropout is identity in eval mode.
    # TODO(synk): training-mode dropout (pltpu.prng_random_bits keep-mask) not implemented.
    # fc2 (Hp -> 1): VPU multiply + XLU cross-lane reduce (no MXU push for a 1-wide output);
    # b2 is an SMEM scalar, so no padded VMEM tile for a single float.
    col = jnp.sum(h * w2_ref[...], axis=-1, keepdims=True) + b2_ref[0]   # (tile_b, 1) f32
    # Lane-dense store: transpose the column to a (1, tile_b) row (XLU work, a free slot
    # here) so the output store is full-lane instead of tile_b/8 one-lane masked stores.
    o_ref[0] = col.T.astype(o_ref.dtype)   # o_ref block is (1, 1, tile_b)


def _default_tile_b(B: int) -> int:
    # B here is >= 8 (wrapper pads the degenerate <8 case).
    if B <= 512:
        # Small batch: one (or two) steps is cheapest; last <=7 rows ride in a partial block.
        return max(8, (B // 8) * 8)
    # Large batch: aim for >= 4 grid steps so dimension_semantics=("parallel",) can give
    # both TensorCores on v7x at least 2 steps and the x DMA overlaps compute, while keeping
    # tiles of 256..2048 rows to amortize the ~0.35us/step pipeline overhead on single-TC
    # v5e/v6e. Per-step footprint at 2048 rows x 256 lanes f32 is ~2.5 MiB, far below the
    # scoped-VMEM defaults on v5e (16 MiB) / v6e (32 MiB) / v7x (32 of 64 MiB), so occupancy
    # (not VMEM) drives the choice.  tile_b is also a user knob for per-generation tuning.
    return min(2048, max(256, _round_up(-(-B // 4), 256)))


def outcome_mlp(x, w1, b1, w2, b2, *, tile_b=None, exact_gelu=False,
                bf16_matmul=False, x_buffers=None):
    """OutcomeMLP forward: fc1 -> GELU -> dropout(eval, identity) -> fc2 -> squeeze(-1).

    x: (B, D) f32; w1: (D, H); b1: (1, H); w2: (1, H); b2: (1,). Returns (B,) f32.
    exact_gelu=True gives erf parity with nn.GELU() (slower, VALU-bound).
    bf16_matmul=True streams x/w1 as bf16 (half the x HBM traffic, MXU-native; f32 accum).
    """
    B, D = x.shape
    H = w1.shape[1]
    assert w1.shape == (D, H) and b1.shape == (1, H)
    assert w2.shape == (1, H) and b2.shape == (1,)

    # (6) Zero-pad H to a full 128-lane multiple (216 -> 256): unmasked VPU/XLU ops.
    # Padded columns are exactly zero through GELU and contribute 0 to the fc2 sum.
    Hp = max(128, _round_up(H, 128))
    if Hp != H:
        w1 = jnp.pad(w1, ((0, 0), (0, Hp - H)))
        b1 = jnp.pad(b1, ((0, 0), (0, Hp - H)))
        w2 = jnp.pad(w2, ((0, 0), (0, Hp - H)))

    # (2) bf16 streaming path: cast in the wrapper so the kernel DMAs half the x bytes and
    # never re-casts the grid-invariant w1; accumulation stays f32 inside the kernel.
    if bf16_matmul:
        x = x.astype(jnp.bfloat16)
        w1 = w1.astype(jnp.bfloat16)

    # Degenerate tiny batch only: pad to a full 8-row sublane group.
    B_rows = B
    if B_rows < 8:
        x = jnp.pad(x, ((0, 8 - B_rows), (0, 0)))
        B_rows = 8

    if tile_b is None:
        tile_b = _default_tile_b(B_rows)
    tile_b = int(tile_b)
    assert tile_b % 8 == 0, "tile_b must be a multiple of 8 sublanes"

    # (4) No jnp.pad of x up to a tile multiple: Pallas handles the partial last block.
    # Rows past B read unspecified data; their outputs are dropped by the final [:B].
    num_tiles = pl.cdiv(B_rows, tile_b)

    if x_buffers is None:
        x_spec = pl.BlockSpec((tile_b, D), lambda i: (i, 0))
    else:
        # (7) Deeper multi-buffering for the x stream if profiling shows exposed DMA.
        x_spec = pl.BlockSpec((tile_b, D), lambda i: (i, 0),
                              pipeline_mode=pl.Buffered(x_buffers))

    kernel = functools.partial(_mlp_kernel, exact_gelu=exact_gelu)

    out = pl.pallas_call(
        kernel,
        # (3) Lane-dense output: one (1, tile_b) row per grid step instead of a (tile_b, 1)
        # column (1/128 lane occupancy + ~1 MiB of padded, double-buffered output VMEM).
        out_shape=jax.ShapeDtypeStruct((num_tiles, 1, tile_b), jnp.float32),
        grid_spec=pltpu.PrefetchScalarGridSpec(
            num_scalar_prefetch=0,
            grid=(num_tiles,),
            in_specs=[
                x_spec,                                              # streamed x tiles
                pl.BlockSpec((D, Hp), lambda i: (0, 0)),             # resident w1
                pl.BlockSpec((1, Hp), lambda i: (0, 0)),             # resident b1
                pl.BlockSpec((1, Hp), lambda i: (0, 0)),             # resident w2 row
                pl.BlockSpec(memory_space=pltpu.MemorySpace.SMEM),   # b2 scalar in SMEM
            ],
            out_specs=pl.BlockSpec((1, 1, tile_b), lambda i: (i, 0, 0)),
        ),
        compiler_params=pltpu.CompilerParams(
            # Independent batch tiles -> shards grid steps across the 2 TCs on v7x.
            dimension_semantics=("parallel",),
        ),
    )(x, w1, b1, w2, b2)
    # Row-major flatten restores batch order; drop rows past B (partial last tile / <8 pad).
    return out.reshape(-1)[:B]


def _reference(x, w1, b1, w2, b2, *, approximate):
    h = x @ w1 + b1
    if approximate:
        h = jax.nn.gelu(h, approximate=True)
    else:
        h = 0.5 * h * (1.0 + jax.lax.erf(h / jnp.sqrt(2.0).astype(jnp.float32)))
    return jnp.sum(h * w2, axis=-1) + b2[0]


if __name__ == "__main__":
    batch = 8
    model_dim = 32
    hidden_dim = 216  # OutcomeMLP default; padded to 256 lanes inside the wrapper

    key = jax.random.PRNGKey(0)
    kx, k1, k2, k3, k4 = jax.random.split(key, 5)
    x = jax.random.normal(kx, (batch, model_dim), dtype=jnp.float32)

    bound1 = 1.0 / math.sqrt(model_dim)
    w1 = jax.random.uniform(k1, (model_dim, hidden_dim), jnp.float32, -bound1, bound1)
    b1 = jax.random.uniform(k2, (1, hidden_dim), jnp.float32, -bound1, bound1)
    bound2 = 1.0 / math.sqrt(hidden_dim)
    w2 = jax.random.uniform(k3, (1, hidden_dim), jnp.float32, -bound2, bound2)
    b2 = jax.random.uniform(k4, (1,), jnp.float32, -bound2, bound2)

    # Default (performance) path: tanh/EUP GELU.
    y = jax.block_until_ready(outcome_mlp(x, w1, b1, w2, b2))
    assert y.shape == (batch,)
    assert jnp.allclose(y, _reference(x, w1, b1, w2, b2, approximate=True),
                        atol=1e-4, rtol=1e-4)

    # Exact erf path: parity with PyTorch nn.GELU() (slow path, flag-gated).
    y_exact = jax.block_until_ready(outcome_mlp(x, w1, b1, w2, b2, exact_gelu=True))
    assert jnp.allclose(y_exact, _reference(x, w1, b1, w2, b2, approximate=False),
                        atol=1e-4, rtol=1e-4)

    # Multi-tile path with a partial last block (B=10, tile_b=8 -> grid of 2, no pad copy).
    x2 = jax.random.normal(jax.random.PRNGKey(1), (10, model_dim), dtype=jnp.float32)
    y2 = jax.block_until_ready(outcome_mlp(x2, w1, b1, w2, b2, tile_b=8))
    assert y2.shape == (10,)
    assert jnp.allclose(y2, _reference(x2, w1, b1, w2, b2, approximate=True),
                        atol=1e-4, rtol=1e-4)

    # bf16-streamed x/w1 fast path (reduced precision by design): compare against the
    # reference evaluated on bf16-rounded x/w1.
    y3 = jax.block_until_ready(outcome_mlp(x2, w1, b1, w2, b2, bf16_matmul=True))
    x2_r = x2.astype(jnp.bfloat16).astype(jnp.float32)
    w1_r = w1.astype(jnp.bfloat16).astype(jnp.float32)
    assert jnp.allclose(y3, _reference(x2_r, w1_r, b1, w2, b2, approximate=True),
                        atol=2e-2, rtol=2e-2)

    print("KERNEL_OK")
</pallas_src>

<mosaic_0001>
module attributes {stable_mosaic.version = 11 : i64} {
  func.func @_mlp_kernel(%arg0: i32, %arg1: memref<8x32xf32, #tpu.memory_space<vmem>>, %arg2: memref<32x256xf32, #tpu.memory_space<vmem>>, %arg3: memref<1x256xf32, #tpu.memory_space<vmem>>, %arg4: memref<1x256xf32, #tpu.memory_space<vmem>>, %arg5: memref<1xf32, #tpu.memory_space<smem>>, %arg6: memref<1x1x8xf32, #tpu.memory_space<vmem>>) attributes {dimension_semantics = [#tpu.dimension_semantics<parallel>], iteration_bounds = array<i64: 1>, scalar_prefetch = 0 : i64, scratch_operands = 0 : i64, tpu.core_type = #tpu.core_type<tc>, window_params = [{transform_indices = @transform_0, window_bounds = array<i64: 8, 32>}, {pipeline_mode = #tpu.pipeline_mode<synchronous>, transform_indices = @transform_1, window_bounds = array<i64: 32, 256>}, {pipeline_mode = #tpu.pipeline_mode<synchronous>, transform_indices = @transform_2, window_bounds = array<i64: 1, 256>}, {pipeline_mode = #tpu.pipeline_mode<synchronous>, transform_indices = @transform_3, window_bounds = array<i64: 1, 256>}, {transform_indices = @transform_4, window_bounds = array<i64: 1>}, {transform_indices = @transform_5, window_bounds = array<i64: 1, 1, 8>}]} {
    %c0 = arith.constant 0 : index
    %c0_0 = arith.constant 0 : index
    %0 = vector.load %arg1[%c0, %c0_0] : memref<8x32xf32, #tpu.memory_space<vmem>>, vector<8x32xf32>
    %c0_1 = arith.constant 0 : index
    %c0_2 = arith.constant 0 : index
    %1 = vector.load %arg2[%c0_1, %c0_2] : memref<32x256xf32, #tpu.memory_space<vmem>>, vector<32x256xf32>
    %cst = arith.constant dense<0.000000e+00> : vector<8x256xf32>
    %2 = tpu.matmul %0, %1, %cst {dimension_numbers = #tpu.dot_dimension_numbers<[1], [0], [0], [1], [0, 0, 1, 1], [], []>} : vector<8x32xf32>, vector<32x256xf32>, vector<8x256xf32> -> vector<8x256xf32>
    %c0_3 = arith.constant 0 : index
    %c0_4 = arith.constant 0 : index
    %3 = vector.load %arg3[%c0_3, %c0_4] : memref<1x256xf32, #tpu.memory_space<vmem>>, vector<1x256xf32>
    %4 = vector.broadcast %3 : vector<1x256xf32> to vector<8x256xf32>
    %5 = arith.addf %2, %4 : vector<8x256xf32>
    %6 = arith.mulf %5, %5 : vector<8x256xf32>
    %7 = arith.mulf %5, %6 : vector<8x256xf32>
    %cst_5 = arith.constant 4.471500e-02 : f32
    %8 = vector.broadcast %cst_5 : f32 to vector<8x256xf32>
    %9 = arith.mulf %8, %7 : vector<8x256xf32>
    %10 = arith.addf %5, %9 : vector<8x256xf32>
    %cst_6 = arith.constant 0.797884583 : f32
    %11 = vector.broadcast %cst_6 : f32 to vector<8x256xf32>
    %12 = arith.mulf %11, %10 : vector<8x256xf32>
    %13 = math.tanh %12 : vector<8x256xf32>
    %cst_7 = arith.constant 1.000000e+00 : f32
    %14 = vector.broadcast %cst_7 : f32 to vector<8x256xf32>
    %15 = arith.addf %14, %13 : vector<8x256xf32>
    %cst_8 = arith.constant 5.000000e-01 : f32
    %16 = vector.broadcast %cst_8 : f32 to vector<8x256xf32>
    %17 = arith.mulf %16, %15 : vector<8x256xf32>
    %18 = arith.mulf %5, %17 : vector<8x256xf32>
    %c0_9 = arith.constant 0 : index
    %c0_10 = arith.constant 0 : index
    %19 = vector.load %arg4[%c0_9, %c0_10] : memref<1x256xf32, #tpu.memory_space<vmem>>, vector<1x256xf32>
    %20 = vector.broadcast %19 : vector<1x256xf32> to vector<8x256xf32>
    %21 = arith.mulf %18, %20 : vector<8x256xf32>
    %cst_11 = arith.constant dense<0.000000e+00> : vector<8xf32>
    %22 = vector.multi_reduction <add>, %21, %cst_11 [1] : vector<8x256xf32> to vector<8xf32>
    %23 = vector.shape_cast %22 : vector<8xf32> to vector<8x1xf32>
    %c0_12 = arith.constant 0 : index
    %24 = memref.load %arg5[%c0_12] : memref<1xf32, #tpu.memory_space<smem>>
    %25 = vector.broadcast %24 : f32 to vector<8x1xf32>
    %26 = arith.addf %23, %25 : vector<8x1xf32>
    %27 = tpu.transpose %26, [1, 0] : vector<8x1xf32> -> vector<1x8xf32>
    %c0_13 = arith.constant 0 : index
    %c0_14 = arith.constant 0 : index
    %c0_15 = arith.constant 0 : index
    %28 = vector.load %arg6[%c0_13, %c0_14, %c0_15] : memref<1x1x8xf32, #tpu.memory_space<vmem>>, vector<1x1x8xf32>
    %29 = vector.shape_cast %28 : vector<1x1x8xf32> to vector<1x8xf32>
    %30 = vector.shape_cast %27 : vector<1x8xf32> to vector<1x1x8xf32>
    tpu.vector_store %arg6[%c0_13, %c0_14, %c0_15], %30 {strides = array<i32>} : memref<1x1x8xf32, #tpu.memory_space<vmem>>, vector<1x1x8xf32>,
    return
  }
  func.func @transform_0(%arg0: i32) -> (i32, i32) {
    %c0_i32 = arith.constant 0 : i32
    %c0_i32_0 = arith.constant 0 : i32
    return %arg0, %c0_i32 : i32, i32
  }
  func.func @transform_1(%arg0: i32) -> (i32, i32) {
    %c0_i32 = arith.constant 0 : i32
    %c0_i32_0 = arith.constant 0 : i32
    %c0_i32_1 = arith.constant 0 : i32
    return %c0_i32, %c0_i32_0 : i32, i32
  }
  func.func @transform_2(%arg0: i32) -> (i32, i32) {
    %c0_i32 = arith.constant 0 : i32
    %c0_i32_0 = arith.constant 0 : i32
    %c0_i32_1 = arith.constant 0 : i32
    return %c0_i32, %c0_i32_0 : i32, i32
  }
  func.func @transform_3(%arg0: i32) -> (i32, i32) {
    %c0_i32 = arith.constant 0 : i32
    %c0_i32_0 = arith.constant 0 : i32
    %c0_i32_1 = arith.constant 0 : i32
    return %c0_i32, %c0_i32_0 : i32, i32
  }
  func.func @transform_4(%arg0: i32) -> i32 {
    %c0_i32 = arith.constant 0 : i32
    %c0_i32_0 = arith.constant 0 : i32
    return %c0_i32 : i32
  }
  func.func @transform_5(%arg0: i32) -> (i32, i32, i32) {
    %c0_i32 = arith.constant 0 : i32
    %c0_i32_0 = arith.constant 0 : i32
    %c0_i32_1 = arith.constant 0 : i32
    return %arg0, %c0_i32, %c0_i32_0 : i32, i32, i32
  }
}

</mosaic_0001>

<llo_original>
// kernel: tpu_custom_call.1
$region0: #{tpu_custom_call.1}
  #allocation0 [shape = 'u32[]', space=smem, size = 0x4, offset = 0x4, fixed_abs, tag = 'smem constant byte address 0x4 - core index']
  #allocation1 [shape = 'u32[72,128]{1,0:T(1,128)}', space=vmem, size = 0x9000, scoped, tag = 'internal scratch']
  #allocation2 [shape = 'f32[1]{0:T(128)S(6)}', space=smem, size = 0x200, scoped, tag = 'scoped memory for tpu_custom_call.1']
  %s0 = inlined_call_operand.hbm [shape: f32[8,32], index: 0, kind: input, shape index: {}]
  %s1 = inlined_call_operand.hbm [shape: f32[32,256], index: 1, kind: input, shape index: {}]
  %s2 = inlined_call_operand.vmem [shape: f32[1,256], index: 2, kind: input, shape index: {}]
  %s3 = inlined_call_operand.vmem [shape: f32[1,256], index: 3, kind: input, shape index: {}]
  %s4 = inlined_call_operand.<no memory space> [shape: f32[1], index: 4, kind: input, shape index: {}]
  %s5 = inlined_call_operand.hbm [shape: f32[1,1,8], index: 5, kind: output, shape index: {}]
  %s6 = sld [smem:[#allocation0]]
  $region38: #{tpu_custom_call.1} parent=0
    _
  %s8 = ssub.s32 1, %s6
  %s9 = scalar_select 0, %s8, %s6
  %10 = sst [smem:[#allocation2]] %s4
  $region1: #{tpu_custom_call.1} parent=0
    #allocation3 [shape = 'u8[4096]{0}', space=vmem, size = 0x1000, scoped, tag = 'input window, operand 0, single buffered']
    #allocation4 [shape = 's32[1]{0}', space=sflag, size = 0x4, scoped, tag = 'scoped memory for tpu_custom_call.1']
    #allocation5 [shape = 's32[1]{0}', space=sflag, size = 0x4, scoped, tag = 'scoped memory for tpu_custom_call.1']
    #allocation6 [shape = 'u8[32768]{0}', space=vmem, size = 0x8000, scoped, tag = 'input window, operand 1, single buffered']
    #allocation7 [shape = 's32[1]{0}', space=sflag, size = 0x4, scoped, tag = 'scoped memory for tpu_custom_call.1']
    #allocation8 [shape = 'u8[512]{0}', space=vmem, size = 0x400, scoped, tag = 'output window, operand 0, single buffered']
    %11 = vsyncpa [#allocation4], 0
    %12 = vsyncpa [#allocation7], 0
    %13 = vsyncpa [#allocation5], 0
    // Predicated region
    $region2: #{tpu_custom_call.1} parent=1 // pred_check
      _
    $region3: #{tpu_custom_call.1} parent=1 // pred_check_branch
      %15 = sbr.rel (0) target = $region5
    $region4: #{tpu_custom_call.1} parent=1 // pred_region
      %17 = vsyncadd [#allocation4], 0
      %s19 = sshll.u32 %s0, 4
      %s20 = int_to_ptr.hbm [resolvable:$true] %s19
      %s21 = sshll.u32 [#allocation3], 4
      %s22 = int_to_ptr.vmem [resolvable:$true] %s21
      %24 = dma.hbm_to_vmem [thread:$0]  %s20, 128, %s22, [#allocation4]
    $region5: #{tpu_custom_call.1} parent=1 // pred_fallthru
      _
    // Predicated region
    $region6: #{tpu_custom_call.1} parent=1 // pred_check
      _
    $region7: #{tpu_custom_call.1} parent=1 // pred_check_branch
      %26 = sbr.rel (0) target = $region9
    $region8: #{tpu_custom_call.1} parent=1 // pred_region
      %28 = vsyncadd [#allocation7], 0
      %s29 = sshll.u32 %s1, 4
      %s30 = int_to_ptr.hbm [resolvable:$true] %s29
      %s31 = sshll.u32 [#allocation6], 4
      %s32 = int_to_ptr.vmem [resolvable:$true] %s31
      %37 = dma.hbm_to_vmem [thread:$0]  %s30, 1024, %s32, [#allocation7], 256, 256, 16
    $region9: #{tpu_custom_call.1} parent=1 // pred_fallthru
      _
    // Predicated region
    $region10: #{tpu_custom_call.1} parent=1 // pred_check
      _
    $region11: #{tpu_custom_call.1} parent=1 // pred_check_branch
      %39 = sbr.rel (0) target = $region13
    $region12: #{tpu_custom_call.1} parent=1 // pred_region
      _
    $region13: #{tpu_custom_call.1} parent=1 // pred_fallthru
      _
    // Predicated region
    $region14: #{tpu_custom_call.1} parent=1 // pred_check
      _
    $region15: #{tpu_custom_call.1} parent=1 // pred_check_branch
      %41 = sbr.rel (0) target = $region17
    $region16: #{tpu_custom_call.1} parent=1 // pred_region
      _
    $region17: #{tpu_custom_call.1} parent=1 // pred_fallthru
      _
    // Predicated region
    $region18: #{tpu_custom_call.1} parent=1 // pred_check
      _
    $region19: #{tpu_custom_call.1} parent=1 // pred_check_branch
      %43 = sbr.rel (0) target = $region21
    $region20: #{tpu_custom_call.1} parent=1 // pred_region
      _
    $region21: #{tpu_custom_call.1} parent=1 // pred_fallthru
      _
    // Predicated region
    $region22: #{tpu_custom_call.1} parent=1 // pred_check
      _
    $region23: #{tpu_custom_call.1} parent=1 // pred_check_branch
      %45 = sbr.rel (0) target = $region25
    $region24: #{tpu_custom_call.1} parent=1 // pred_region
      %47 = dma.done [#allocation4], 128
    $region25: #{tpu_custom_call.1} parent=1 // pred_fallthru
      _
    // Predicated region
    $region26: #{tpu_custom_call.1} parent=1 // pred_check
      _
    $region27: #{tpu_custom_call.1} parent=1 // pred_check_branch
      %49 = sbr.rel (0) target = $region29
    $region28: #{tpu_custom_call.1} parent=1 // pred_region
      %51 = dma.done [#allocation7], 1024
    $region29: #{tpu_custom_call.1} parent=1 // pred_fallthru
      _
    %v52 = vld [vmem:[#allocation3] sm:$0xff]
    %v53 = vld [vmem:[#allocation6] sm:$0xff]
    %v54 = vld [vmem:[#allocation6 + $0x8] sm:$0xff]
    %v55 = vld [vmem:[#allocation6 + $0x10] sm:$0xff]
    %v56 = vld [vmem:[#allocation6 + $0x18] sm:$0xff]
    %v57 = vld [vmem:[#allocation6 + $0x20] sm:$0xff]
    %v58 = vld [vmem:[#allocation6 + $0x28] sm:$0xff]
    %v59 = vld [vmem:[#allocation6 + $0x30] sm:$0xff]
    %v60 = vld [vmem:[#allocation6 + $0x38] sm:$0xff]
    %v61 = vld [vmem:[%s2] sm:$0x3]
    %v63 = vperm.slane %v61, 0
    %v64 = vperm.slane %v61, 1
    %vm67 = vcmask 261120
    %v69 = vsel %vm67, %v52, 0
    %71 = vmatpush.msra.mxu0 0.0
    %72 = vmatpush.msra.mxu0 0.0
    %73 = vmatpush.msra.mxu0 0.0
    %74 = vmatpush.msra.mxu0 0.0
    %75 = vmatpush.msra.mxu0 0.0
    %76 = vmatpush.msra.mxu0 0.0
    %77 = vmatpush.msra.mxu0 0.0
    %78 = vmatpush.msra.mxu0 0.0
    %79 = vmatpush.msra.mxu0 0.0
    %80 = vmatpush.msra.mxu0 0.0
    %81 = vmatpush.msra.mxu0 0.0
    %82 = vmatpush.msra.mxu0 0.0
    %83 = vmatpush.msra.mxu0 %v59
    %84 = vmatpush.msra.mxu0 %v57
    %85 = vmatpush.msra.mxu0 %v55
    %86 = vmatpush.msra.mxu0 %v53
    %87 = vmatmul.f32.gmra.mxu0 %v69
    %v88 = vpop.f32.mrf.mxu0
    %v89 = vadd.f32 %v63, %v88
    %90 = vdwg.mxu0
    %91 = vmatpush.msra.mxu0 0.0
    %92 = vmatpush.msra.mxu0 0.0
    %93 = vmatpush.msra.mxu0 0.0
    %94 = vmatpush.msra.mxu0 0.0
    %95 = vmatpush.msra.mxu0 0.0
    %96 = vmatpush.msra.mxu0 0.0
    %97 = vmatpush.msra.mxu0 0.0
    %98 = vmatpush.msra.mxu0 0.0
    %99 = vmatpush.msra.mxu0 0.0
    %100 = vmatpush.msra.mxu0 0.0
    %101 = vmatpush.msra.mxu0 0.0
    %102 = vmatpush.msra.mxu0 0.0
    %103 = vmatpush.msra.mxu0 %v60
    %104 = vmatpush.msra.mxu0 %v58
    %105 = vmatpush.msra.mxu0 %v56
    %106 = vmatpush.msra.mxu0 %v54
    %107 = vmatmul.f32.gmra.mxu0 %v69
    %v108 = vpop.f32.mrf.mxu0
    %v109 = vadd.f32 %v64, %v108
    %110 = vdwg.mxu0
    %v111 = vmul.f32 %v89, %v89
    %v112 = vmul.f32 %v109, %v109
    %v113 = vmul.f32 %v89, %v111
    %v114 = vmul.f32 %v109, %v112
    %v115 = vmul.f32 %v113, 0.044715
    %v116 = vmul.f32 %v114, 0.044715
    %v117 = vadd.f32 %v89, %v115
    %v118 = vadd.f32 %v109, %v116
    %v119 = vmul.f32 %v117, 0.7978846
    %v120 = vmul.f32 %v118, 0.7978846
    %v121 = vtanh.pop %v119
    %v122 = vtanh.pop %v120
    %v123 = vadd.f32 %v121, 1.0
    %v124 = vadd.f32 %v122, 1.0
    %v125 = vmul.f32 %v123, 0.5
    %v126 = vmul.f32 %v124, 0.5
    %v127 = vmul.f32 %v89, %v125
    %v128 = vmul.f32 %v109, %v126
    %v129 = vld [vmem:[%s3] sm:$0x3]
    %v131 = vperm.slane %v129, 0
    %v132 = vperm.slane %v129, 1
    %v135 = vmul.f32 %v127, %v131
    %v136 = vmul.f32 %v128, %v132
    %v137 = vadd.f32 %v135, %v136
    %138 = vadd.xlane.f32.xlu0 %v137
    %v139 = vpop.xlane.xlu0 %138
    %s140 = sld [smem:[#allocation2]]
    %v141 = vstv %s140
    %v142 = vadd.f32 %v139, %v141
    %143 = vxpose.xlu0.b32.start [1/16] %v142, 128
    %144 = vxpose.xlu0.b32.cont [2/16] 0.0, 128
    %145 = vxpose.xlu0.b32.cont [3/16] 0.0, 128
    %146 = vxpose.xlu0.b32.cont [4/16] 0.0, 128
    %147 = vxpose.xlu0.b32.cont [5/16] 0.0, 128
    %148 = vxpose.xlu0.b32.cont [6/16] 0.0, 128
    %149 = vxpose.xlu0.b32.cont [7/16] 0.0, 128
    %150 = vxpose.xlu0.b32.cont [8/16] 0.0, 128
    %151 = vxpose.xlu0.b32.cont [9/16] 0.0, 128
    %152 = vxpose.xlu0.b32.cont [10/16] 0.0, 128
    %153 = vxpose.xlu0.b32.cont [11/16] 0.0, 128
    %154 = vxpose.xlu0.b32.cont [12/16] 0.0, 128
    %155 = vxpose.xlu0.b32.cont [13/16] 0.0, 128
    %156 = vxpose.xlu0.b32.cont [14/16] 0.0, 128
    %157 = vxpose.xlu0.b32.cont [15/16] 0.0, 128
    %158 = vxpose.xlu0.b32.end [16/16] 0.0, 128
    %v159 = vpop.trf.xlu0
    %v160 = vpop.trf.xlu0
    %v161 = vpop.trf.xlu0
    %v162 = vpop.trf.xlu0
    %v163 = vpop.trf.xlu0
    %v164 = vpop.trf.xlu0
    %v165 = vpop.trf.xlu0
    %v166 = vpop.trf.xlu0
    %v167 = vpop.trf.xlu0
    %v168 = vpop.trf.xlu0
    %v169 = vpop.trf.xlu0
    %v170 = vpop.trf.xlu0
    %v171 = vpop.trf.xlu0
    %v172 = vpop.trf.xlu0
    %v173 = vpop.trf.xlu0
    %v174 = vpop.trf.xlu0
    %vm175 = vcmask 57344
    %176 = vst.msk [vmem:[#allocation8] sm:$0x1] %vm175, %v159
    // Predicated region
    $region30: #{tpu_custom_call.1} parent=1 // pred_check
      _
    $region31: #{tpu_custom_call.1} parent=1 // pred_check_branch
      %178 = sbr.rel (0) target = $region33
    $region32: #{tpu_custom_call.1} parent=1 // pred_region
      %180 = vsyncadd [#allocation5], 0
      %s182 = sshll.u32 [#allocation8], 4
      %s183 = int_to_ptr.vmem [resolvable:$true] %s182
      %s184 = sshll.u32 %s5, 4
      %s185 = int_to_ptr.hbm [resolvable:$true] %s184
      %187 = dma.vmem_to_hbm [thread:$0]  %s183, 16, %s185, [#allocation5]
    $region33: #{tpu_custom_call.1} parent=1 // pred_fallthru
      _
    // Predicated region
    $region34: #{tpu_custom_call.1} parent=1 // pred_check
      _
    $region35: #{tpu_custom_call.1} parent=1 // pred_check_branch
      %189 = sbr.rel (0) target = $region37
    $region36: #{tpu_custom_call.1} parent=1 // pred_region
      %191 = dma.done [#allocation5], 16
    $region37: #{tpu_custom_call.1} parent=1 // pred_fallthru
      _
    %192 = vsyncpa [#allocation4], 1
    %193 = vsyncpa [#allocation7], 1
    %194 = vsyncpa [#allocation5], 1

</llo_original>
